<compile_context>
chip_gen: v7x
topology: tpu7x:2x2x1
jax: 0.10.0
libtpu: 0.0.40
codegen_flags: <defaults>
</compile_context>

<pallas_src>
import functools

import jax
import jax.numpy as jnp
from jax.experimental import pallas as pl
from jax.experimental.pallas import tpu as pltpu


def _round_up(a: int, b: int) -> int:
    return (a + b - 1) // b * b


def _mean_last_kernel(x_ref, o_ref, acc_ref, *, inv_l):
    # x_ref: (tr, tl) input tile; o_ref: (1, 1, tr) lane-dense output tile;
    # acc_ref: (tr, 1) f32 running sum across the L (last) grid axis.
    k = pl.program_id(1)

    @pl.when(k == 0)
    def _init():
        acc_ref[...] = jnp.zeros_like(acc_ref)

    x = x_ref[...]
    acc_ref[...] += jnp.sum(x.astype(jnp.float32), axis=-1, keepdims=True)

    @pl.when(k == pl.num_programs(1) - 1)
    def _finalize():
        mean_col = acc_ref[...] * inv_l                # (tr, 1) f32
        mean_row = jnp.transpose(mean_col, (1, 0))     # (1, tr), lane-dense
        o_ref[...] = mean_row.reshape(o_ref.shape).astype(o_ref.dtype)


def mean_pool(x):
    """Equivalent of torch.mean(x, dim=-1)."""
    orig_shape = x.shape
    L = orig_shape[-1]
    rows = 1
    for d in orig_shape[:-1]:
        rows *= d

    # TODO(synk): torch.mean raises on integer tensors; here we promote to f32.
    out_dtype = x.dtype if jnp.issubdtype(x.dtype, jnp.floating) else jnp.float32
    itemsize = jnp.dtype(x.dtype).itemsize

    x2d = x.reshape(rows, L)

    # ---- reduction-axis (lane) tiling: full L if small, else 2048-wide chunks.
    MAX_TL = 2048
    if L <= MAX_TL:
        tl, Lp = L, L
    else:
        tl = MAX_TL
        Lp = _round_up(L, tl)          # zero padding: doesn't change the sum

    # ---- row (sublane) tiling: biggest tile within ~8 MiB per input block
    # (double-buffered => ~16 MiB, well under the 32 MiB scoped limit on all
    # generations incl. v7x's 64 MiB VMEM), multiple of 8, capped at 2048 rows,
    # and keep >= ~8 row tiles when rows allow (pipelining + megacore sharding).
    BLOCK_BYTES = 8 * 1024 * 1024
    tr = max(8, (BLOCK_BYTES // (tl * itemsize)) // 8 * 8)
    tr = min(tr, 2048, _round_up(rows, 8))
    MIN_ROW_TILES = 8
    if rows >= MIN_ROW_TILES * 8:
        tr = min(tr, max(8, _round_up(pl.cdiv(rows, MIN_ROW_TILES), 8)))
    rows_p = _round_up(rows, tr)

    if rows_p != rows or Lp != L:
        x2d = jnp.pad(x2d, ((0, rows_p - rows), (0, Lp - L)))

    num_row_tiles = rows_p // tr
    num_k = Lp // tl

    kernel = functools.partial(_mean_last_kernel, inv_l=1.0 / L)

    out3d = pl.pallas_call(
        kernel,
        out_shape=jax.ShapeDtypeStruct((num_row_tiles, 1, tr), out_dtype),
        grid_spec=pltpu.PrefetchScalarGridSpec(
            num_scalar_prefetch=0,
            grid=(num_row_tiles, num_k),
            in_specs=[pl.BlockSpec((tr, tl), lambda i, k: (i, k))],
            out_specs=pl.BlockSpec((1, 1, tr), lambda i, k: (i, 0, 0)),
            scratch_shapes=[pltpu.VMEM((tr, 1), jnp.float32)],
        ),
        compiler_params=pltpu.CompilerParams(
            dimension_semantics=("parallel", "arbitrary"),
            vmem_limit_bytes=32 * 1024 * 1024,
        ),
        cost_estimate=pl.CostEstimate(
            flops=rows_p * Lp + rows_p,
            transcendentals=0,
            bytes_accessed=rows_p * Lp * itemsize
            + num_row_tiles * tr * jnp.dtype(out_dtype).itemsize,
        ),
    )(x2d)

    out_flat = out3d.reshape(num_row_tiles * tr)[:rows]
    return out_flat.reshape(orig_shape[:-1])


if __name__ == "__main__":
    k0, k1 = jax.random.split(jax.random.PRNGKey(0))

    # Small example consistent with MeanPool's forward: mean over dim=-1.
    x = jax.random.normal(k0, (2, 4, 16, 16), dtype=jnp.float32)
    out = jax.block_until_ready(mean_pool(x))
    ref = jnp.mean(x, axis=-1)
    assert out.shape == ref.shape, (out.shape, ref.shape)
    assert jnp.allclose(out, ref, atol=1e-5, rtol=1e-5)

    # Awkward (non-multiple-of-8) shape exercises the row-padding path.
    x2 = jax.random.normal(k1, (3, 5, 7), dtype=jnp.float32)
    out2 = jax.block_until_ready(mean_pool(x2))
    ref2 = jnp.mean(x2, axis=-1)
    assert out2.shape == ref2.shape, (out2.shape, ref2.shape)
    assert jnp.allclose(out2, ref2, atol=1e-5, rtol=1e-5)

    print("KERNEL_OK")
</pallas_src>

<mosaic_0001>
module attributes {stable_mosaic.version = 11 : i64} {
  func.func @_mean_last_kernel(%arg0: i32, %arg1: i32, %arg2: memref<16x16xf32, #tpu.memory_space<vmem>>, %arg3: memref<1x1x16xf32, #tpu.memory_space<vmem>>, %arg4: memref<16x1xf32, #tpu.memory_space<vmem>>) attributes {dimension_semantics = [#tpu.dimension_semantics<parallel>, #tpu.dimension_semantics<arbitrary>], iteration_bounds = array<i64: 8, 1>, scalar_prefetch = 0 : i64, scratch_operands = 1 : i64, tpu.core_type = #tpu.core_type<tc>, window_params = [{transform_indices = @transform_0, window_bounds = array<i64: 16, 16>}, {transform_indices = @transform_1, window_bounds = array<i64: 1, 1, 16>}]} {
    %c0_i32 = arith.constant 0 : i32
    %0 = arith.cmpi eq, %arg1, %c0_i32 : i32
    %1 = arith.extui %0 : i1 to i32
    %c0_i32_0 = arith.constant 0 : i32
    %2 = arith.cmpi ne, %1, %c0_i32_0 : i32
    scf.if %2 {
      %cst_8 = arith.constant 0.000000e+00 : f32
      %12 = vector.broadcast %cst_8 : f32 to vector<16x1xf32>
      %c0_9 = arith.constant 0 : index
      %c0_10 = arith.constant 0 : index
      %13 = vector.load %arg4[%c0_9, %c0_10] : memref<16x1xf32, #tpu.memory_space<vmem>>, vector<16x1xf32>
      tpu.vector_store %arg4[%c0_9, %c0_10], %12 {strides = array<i32>} : memref<16x1xf32, #tpu.memory_space<vmem>>, vector<16x1xf32>,
    } else {
    }
    %c0 = arith.constant 0 : index
    %c0_1 = arith.constant 0 : index
    %3 = vector.load %arg2[%c0, %c0_1] : memref<16x16xf32, #tpu.memory_space<vmem>>, vector<16x16xf32>
    %c0_2 = arith.constant 0 : index
    %c0_3 = arith.constant 0 : index
    %4 = vector.load %arg4[%c0_2, %c0_3] : memref<16x1xf32, #tpu.memory_space<vmem>>, vector<16x1xf32>
    %cst = arith.constant dense<0.000000e+00> : vector<16xf32>
    %5 = vector.multi_reduction <add>, %3, %cst [1] : vector<16x16xf32> to vector<16xf32>
    %6 = vector.shape_cast %5 : vector<16xf32> to vector<16x1xf32>
    %7 = arith.addf %4, %6 : vector<16x1xf32>
    %c0_4 = arith.constant 0 : index
    %c0_5 = arith.constant 0 : index
    %8 = vector.load %arg4[%c0_4, %c0_5] : memref<16x1xf32, #tpu.memory_space<vmem>>, vector<16x1xf32>
    tpu.vector_store %arg4[%c0_4, %c0_5], %7 {strides = array<i32>} : memref<16x1xf32, #tpu.memory_space<vmem>>, vector<16x1xf32>,
    %c0_i32_6 = arith.constant 0 : i32
    %9 = arith.cmpi eq, %arg1, %c0_i32_6 : i32
    %10 = arith.extui %9 : i1 to i32
    %c0_i32_7 = arith.constant 0 : i32
    %11 = arith.cmpi ne, %10, %c0_i32_7 : i32
    scf.if %11 {
      %c0_8 = arith.constant 0 : index
      %c0_9 = arith.constant 0 : index
      %12 = vector.load %arg4[%c0_8, %c0_9] : memref<16x1xf32, #tpu.memory_space<vmem>>, vector<16x1xf32>
      %cst_10 = arith.constant 6.250000e-02 : f32
      %13 = vector.broadcast %cst_10 : f32 to vector<16x1xf32>
      %14 = arith.mulf %12, %13 : vector<16x1xf32>
      %15 = tpu.transpose %14, [1, 0] : vector<16x1xf32> -> vector<1x16xf32>
      %16 = vector.shape_cast %15 : vector<1x16xf32> to vector<1x1x16xf32>
      %c0_11 = arith.constant 0 : index
      %c0_12 = arith.constant 0 : index
      %c0_13 = arith.constant 0 : index
      %17 = vector.load %arg3[%c0_11, %c0_12, %c0_13] : memref<1x1x16xf32, #tpu.memory_space<vmem>>, vector<1x1x16xf32>
      tpu.vector_store %arg3[%c0_11, %c0_12, %c0_13], %16 {strides = array<i32>} : memref<1x1x16xf32, #tpu.memory_space<vmem>>, vector<1x1x16xf32>,
    } else {
    }
    return
  }
  func.func @transform_0(%arg0: i32, %arg1: i32) -> (i32, i32) {
    %c0_i32 = arith.constant 0 : i32
    return %arg0, %arg1 : i32, i32
  }
  func.func @transform_1(%arg0: i32, %arg1: i32) -> (i32, i32, i32) {
    %c0_i32 = arith.constant 0 : i32
    %c0_i32_0 = arith.constant 0 : i32
    %c0_i32_1 = arith.constant 0 : i32
    return %arg0, %c0_i32, %c0_i32_0 : i32, i32, i32
  }
}

</mosaic_0001>

<llo_original>
// kernel: tpu_custom_call.1
$region0: #{tpu_custom_call.1}
  #allocation0 [shape = 'u32[]', space=smem, size = 0x4, offset = 0x4, fixed_abs, tag = 'smem constant byte address 0x4 - core index']
  #allocation1 [shape = 'u32[144,128]{1,0:T(1,128)}', space=vmem, size = 0x12000, scoped, tag = 'internal scratch']
  #allocation2 [shape = 'f32[16,1]{1,0:T(8,128)}', space=vmem, size = 0x2000, scoped, tag = 'scratch operand']
  %s0 = inlined_call_operand.vmem [shape: f32[128,16], index: 0, kind: input, shape index: {}]
  %s1 = inlined_call_operand.hbm [shape: f32[8,1,16], index: 1, kind: output, shape index: {}]
  %s2 = sld [smem:[#allocation0]]
  $region45: #{tpu_custom_call.1} parent=0
    _
  %s4 = ssub.s32 1, %s2
  %s5 = scalar_select 0, %s4, %s2
  $region1: #{tpu_custom_call.1} parent=0
    #allocation3 [shape = 'u8[1024]{0}', space=vmem, size = 0x400, scoped, tag = 'output window, operand 0']
    #allocation4 [shape = 's32[2]{0}', space=sflag, size = 0x8, scoped, tag = 'scoped memory for tpu_custom_call.1']
    %6 = vsyncpa [#allocation4], 0
    %s7 = scalar_lea.sflag [#allocation4], 1
    %8 = vsyncpa %s7, 0
    loop: start=0, step=1, limit=10
    $region2: #{tpu_custom_call.1} parent=1 // loop_pre_header
      _
    $region3: #{tpu_custom_call.1} parent=1 // loop_header
      %s10 = sphi 0, %s14
      %p11 = scmp.ge.s32.totalorder %s10, 10
      %s17 = sphi 0, %s29
      %s18 = sphi 0, %s25
      %s19 = sphi 0, %s17
      %s20 = sphi 0, %s18
      %s21 = sphi 0, %s19
      %s22 = sphi 0, %s20
      %s34 = sphi 0, %s36
      %s37 = sphi 0, %s34
      %s38 = sphi 0, %s37
      %s54 = sphi 0, %s38
      %s60 = sphi 0, %s62
      %s63 = sphi 0, %s60
      %s64 = sphi 0, %s63
      %s80 = sphi 0, %s64
    $region4: #{tpu_custom_call.1} parent=1 // loop_header_branch
      %13 = sbr.rel (%p11) target = $region8
    $region5: #{tpu_custom_call.1} parent=1 // loop_body
      %s15 = ssub.s32 %s10, 1
      %s16 = ssub.s32 %s10, 2
      %s23 = sadd.s32 1, %s18
      %p24 = scmp.ge.s32.totalorder %s23, 1
      %s25 = scalar_select %p24, 0, %s23
      %s26 = sadd.s32 1, %s17
      %s27 = scalar_select %p24, %s26, %s17
      %p28 = scmp.ge.s32.totalorder %s27, 8
      %s29 = scalar_select %p28, 0, %s27
      %s30 = ssub.s32 %s17, %s29
      %s31 = ssub.s32 %s18, %s25
      %s32 = sor.u32 %s30, %s31
      %p33 = scmp.eq.s32.totalorder %s32, 0
      %s35 = sadd.s32 %s34, 1
      %s36 = scalar_select %p33, %s34, %s35
      %p39 = pneg %p33
      %p40 = scmp.eq.s32.totalorder %s10, 7
      %p41 = por %p39, %p40
      %p42 = scmp.ne.s32.totalorder %s34, %s37
      %p43 = scmp.eq.s32.totalorder %s10, 0
      %p44 = por %p42, %p43
      %p45 = scmp.ne.s32.totalorder %s34, %s37
      %p46 = scmp.eq.s32.totalorder %s15, 7
      %p47 = por %p45, %p46
      %p48 = scmp.ne.s32.totalorder %s37, %s38
      %p49 = scmp.eq.s32.totalorder %s15, 0
      %p50 = por %p48, %p49
      %p51 = scmp.ne.s32.totalorder %s37, %s38
      %p52 = scmp.eq.s32.totalorder %s16, 7
      %p53 = por %p51, %p52
      %p55 = scmp.ne.s32.totalorder %s38, %s54
      %p56 = scmp.eq.s32.totalorder %s16, 0
      %p57 = por %p55, %p56
      %s58 = ssub.s32 %s17, %s29
      %p59 = scmp.eq.s32.totalorder %s58, 0
      %s61 = sadd.s32 %s60, 1
      %s62 = scalar_select %p59, %s60, %s61
      %p65 = pneg %p59
      %p66 = scmp.eq.s32.totalorder %s10, 7
      %p67 = por %p65, %p66
      %p68 = scmp.ne.s32.totalorder %s60, %s63
      %p69 = scmp.eq.s32.totalorder %s10, 0
      %p70 = por %p68, %p69
      %p71 = scmp.ne.s32.totalorder %s60, %s63
      %p72 = scmp.eq.s32.totalorder %s15, 7
      %p73 = por %p71, %p72
      %p74 = scmp.ne.s32.totalorder %s63, %s64
      %p75 = scmp.eq.s32.totalorder %s15, 0
      %p76 = por %p74, %p75
      %p77 = scmp.ne.s32.totalorder %s63, %s64
      %p78 = scmp.eq.s32.totalorder %s16, 7
      %p79 = por %p77, %p78
      %p81 = scmp.ne.s32.totalorder %s64, %s80
      %p82 = scmp.eq.s32.totalorder %s16, 0
      %p83 = por %p81, %p82
      %p84 = scmp.le.s32.totalorder 1, %s10
      %p85 = scmp.lt.s32.totalorder %s10, 9
      %p86 = pnand %p84, %p85
      %p87 = pneg %p86
      // Predicated region
      $region9: #{tpu_custom_call.1} parent=5 // pred_check
        _
      $region10: #{tpu_custom_call.1} parent=5 // pred_check_branch
        %89 = sbr.rel (%p86) target = $region12
      $region11: #{tpu_custom_call.1} parent=5 // pred_region
        %s90 = ssub.s32 %s10, 1
      $region12: #{tpu_custom_call.1} parent=5 // pred_fallthru
        _
      %p91 = scmp.lt.s32.totalorder %s10, 8
      // Predicated region
      $region13: #{tpu_custom_call.1} parent=5 // pred_check
        %p92 = pneg %p91
      $region14: #{tpu_custom_call.1} parent=5 // pred_check_branch
        %94 = sbr.rel (%p92) target = $region16
      $region15: #{tpu_custom_call.1} parent=5 // pred_region
        // Predicated region
        $region17: #{tpu_custom_call.1} parent=15 // pred_check
          %p95 = pneg %p44
        $region18: #{tpu_custom_call.1} parent=15 // pred_check_branch
          %97 = sbr.rel (%p95) target = $region20
        $region19: #{tpu_custom_call.1} parent=15 // pred_region
          %s98 = smul.u32 2, %s17
          %p99 = scmp.lt.s32.totalorder %s98, 15
          %s100 = scalar_select %p99, %s98, 15
          %p101 = scmp.lt.s32.totalorder %s18, 0
          %s102 = scalar_select %p101, %s18, 0
          %s103 = sadd.s32 %s102, %s100
          %s104 = smul.addr %s103, 8
          %s105 = scalar_lea.vmem %s0, %s104
          %s106 = smul.u32 2, %s17
        $region20: #{tpu_custom_call.1} parent=15 // pred_fallthru
          _
      $region16: #{tpu_custom_call.1} parent=5 // pred_fallthru
        _
      %p107 = scmp.le.s32.totalorder 1, %s10
      %p108 = scmp.lt.s32.totalorder %s10, 9
      %p109 = pnand %p107, %p108
      %p110 = pneg %p109
      // Predicated region
      $region21: #{tpu_custom_call.1} parent=5 // pred_check
        _
      $region22: #{tpu_custom_call.1} parent=5 // pred_check_branch
        %112 = sbr.rel (%p109) target = $region24
      $region23: #{tpu_custom_call.1} parent=5 // pred_region
        %s113 = ssub.s32 %s10, 1
        %s114 = smul.u32 2, %s19
        %p115 = scmp.lt.s32.totalorder %s114, 15
        %s116 = scalar_select %p115, %s114, 15
        %p117 = scmp.lt.s32.totalorder %s20, 0
        %s118 = scalar_select %p117, %s20, 0
        %s119 = sadd.s32 %s118, %s116
        %s120 = smul.addr %s119, 8
        %s121 = scalar_lea.vmem %s0, %s120
        %p122 = pneg %p50
        %p123 = pneg %p47
        %p124 = pneg %p76
        %p125 = pneg %p73
        %s126 = sand.u32 %s63, 1
        %s127 = scalar_lea.sflag [#allocation4], %s126
        %s128 = sand.u32 %s63, 1
        %s129 = scalar_lea.vmem [#allocation3], %s128
        %s130 = smul.u32 2, %s19
        %p131 = scmp.lt.s32.totalorder %s130, 15
        %s132 = scalar_select %p131, %s130, 15
        %p133 = scmp.lt.s32.totalorder %s20, 0
        %s134 = scalar_select %p133, %s20, 0
        %s135 = sadd.s32 %s134, %s132
        %s136 = smul.addr %s135, 8
        %s137 = scalar_lea.vmem %s0, %s136
        %s138 = smul.u32 2, %s19
        %p139 = scmp.eq.s32.totalorder %s20, 0
        // Predicated region
        $region25: #{tpu_custom_call.1} parent=23 // pred_check
          %p140 = pneg %p139
        $region26: #{tpu_custom_call.1} parent=23 // pred_check_branch
          %142 = sbr.rel (%p140) target = $region28
        $region27: #{tpu_custom_call.1} parent=23 // pred_region
          %vm143 = vcmask 7168
          %144 = vst.msk [vmem:[#allocation2] sm:$0xff] %vm143, 0.0
          %145 = vst.msk [vmem:[#allocation2 + $0x8] sm:$0xff] %vm143, 0.0
        $region28: #{tpu_custom_call.1} parent=23 // pred_fallthru
          _
        %v146 = vld [vmem:[%s137] sm:$0xff]
        %v147 = vld [vmem:[%s137 + $0x8] sm:$0xff]
        %v148 = vld [vmem:[#allocation2] sm:$0xff]
        %v149 = vld [vmem:[#allocation2 + $0x8] sm:$0xff]
        %vm150 = vcmask 130048
        %v151 = vsel %vm150, %v146, 0.0
        %152 = vadd.xlane.f32.xlu0 %v151
        %v153 = vpop.xlane.xlu0 %152
        %v154 = vsel %vm150, %v147, 0.0
        %155 = vadd.xlane.f32.xlu0 %v154
        %v156 = vpop.xlane.xlu0 %155
        %v157 = vadd.f32 %v148, %v153
        %v158 = vadd.f32 %v149, %v156
        %vm159 = vcmask 7168
        %160 = vst.msk [vmem:[#allocation2] sm:$0xff] %vm159, %v157
        %161 = vst.msk [vmem:[#allocation2 + $0x8] sm:$0xff] %vm159, %v158
        // Predicated region
        $region29: #{tpu_custom_call.1} parent=23 // pred_check
          %p162 = pneg %p139
        $region30: #{tpu_custom_call.1} parent=23 // pred_check_branch
          %164 = sbr.rel (%p162) target = $region32
        $region31: #{tpu_custom_call.1} parent=23 // pred_region
          %v165 = vld [vmem:[#allocation2] sm:$0xff]
          %v166 = vld [vmem:[#allocation2 + $0x8] sm:$0xff]
          %v167 = vmul.f32 %v165, 0.0625
          %v168 = vmul.f32 %v166, 0.0625
          %169 = vxpose.xlu0.b32.start [1/16] %v167, 128
          %170 = vxpose.xlu0.b32.cont [2/16] %v168, 128
          %171 = vxpose.xlu0.b32.cont [3/16] 0.0, 128
          %172 = vxpose.xlu0.b32.cont [4/16] 0.0, 128
          %173 = vxpose.xlu0.b32.cont [5/16] 0.0, 128
          %174 = vxpose.xlu0.b32.cont [6/16] 0.0, 128
          %175 = vxpose.xlu0.b32.cont [7/16] 0.0, 128
          %176 = vxpose.xlu0.b32.cont [8/16] 0.0, 128
          %177 = vxpose.xlu0.b32.cont [9/16] 0.0, 128
          %178 = vxpose.xlu0.b32.cont [10/16] 0.0, 128
          %179 = vxpose.xlu0.b32.cont [11/16] 0.0, 128
          %180 = vxpose.xlu0.b32.cont [12/16] 0.0, 128
          %181 = vxpose.xlu0.b32.cont [13/16] 0.0, 128
          %182 = vxpose.xlu0.b32.cont [14/16] 0.0, 128
          %183 = vxpose.xlu0.b32.cont [15/16] 0.0, 128
          %184 = vxpose.xlu0.b32.end [16/16] 0.0, 128
          %v185 = vpop.trf.xlu0
          %v186 = vpop.trf.xlu0
          %v187 = vpop.trf.xlu0
          %v188 = vpop.trf.xlu0
          %v189 = vpop.trf.xlu0
          %v190 = vpop.trf.xlu0
          %v191 = vpop.trf.xlu0
          %v192 = vpop.trf.xlu0
          %v193 = vpop.trf.xlu0
          %v194 = vpop.trf.xlu0
          %v195 = vpop.trf.xlu0
          %v196 = vpop.trf.xlu0
          %v197 = vpop.trf.xlu0
          %v198 = vpop.trf.xlu0
          %v199 = vpop.trf.xlu0
          %v200 = vpop.trf.xlu0
          %vm201 = vcmask 122880
          %202 = vst.msk [vmem:[%s129] sm:$0x1] %vm201, %v185
        $region32: #{tpu_custom_call.1} parent=23 // pred_fallthru
          _
        %s203 = sand.u32 %s63, 1
        %s204 = scalar_lea.sflag [#allocation4], %s203
        %s205 = sand.u32 %s63, 1
        %s206 = scalar_lea.vmem [#allocation3], %s205
        // Predicated region
        $region33: #{tpu_custom_call.1} parent=23 // pred_check
          %p207 = pneg %p73
        $region34: #{tpu_custom_call.1} parent=23 // pred_check_branch
          %209 = sbr.rel (%p207) target = $region36
        $region35: #{tpu_custom_call.1} parent=23 // pred_region
          %s211 = ssub.s32 16, 16
          %212 = vsyncadd %s204, %s211
          %s213 = smul.addr %s19, 16
          %s214 = scalar_lea.hbm %s1, %s213
          %s216 = sshll.u32 %s206, 4
          %s217 = int_to_ptr.vmem [resolvable:$true] %s216
          %219 = dma.vmem_to_hbm [thread:$0]  %s217, 16, %s214, %s204
        $region36: #{tpu_custom_call.1} parent=23 // pred_fallthru
          _
      $region24: #{tpu_custom_call.1} parent=5 // pred_fallthru
        _
      %p220 = scmp.le.s32.totalorder 2, %s10
      // Predicated region
      $region37: #{tpu_custom_call.1} parent=5 // pred_check
        %p221 = pneg %p220
      $region38: #{tpu_custom_call.1} parent=5 // pred_check_branch
        %223 = sbr.rel (%p221) target = $region40
      $region39: #{tpu_custom_call.1} parent=5 // pred_region
        %s224 = ssub.s32 %s10, 2
        // Predicated region
        $region41: #{tpu_custom_call.1} parent=39 // pred_check
          %p225 = pneg %p79
        $region42: #{tpu_custom_call.1} parent=39 // pred_check_branch
          %227 = sbr.rel (%p225) target = $region44
        $region43: #{tpu_custom_call.1} parent=39 // pred_region
          %s228 = sand.u32 %s64, 1
          %s229 = scalar_lea.sflag [#allocation4], %s228
          %s230 = sand.u32 %s64, 1
          %s231 = scalar_lea.vmem [#allocation3], %s230
          %232 = dma.done %s229, 16
        $region44: #{tpu_custom_call.1} parent=39 // pred_fallthru
          _
      $region40: #{tpu_custom_call.1} parent=5 // pred_fallthru
        _
    $region6: #{tpu_custom_call.1} parent=1 // loop_footer
      %s14 = sadd.s32 1, %s10
    $region7: #{tpu_custom_call.1} parent=1 // loop_footer_branch
      %9 = sbr.rel target = $region3
    $region8: #{tpu_custom_call.1} parent=1 // loop_exit
      _
    %233 = vsyncpa [#allocation4], 1
    %s234 = scalar_lea.sflag [#allocation4], 1
    %235 = vsyncpa %s234, 1

</llo_original>
